<compile_context>
chip_gen: v7x
topology: tpu7x:2x2x1
jax: 0.10.0
libtpu: 0.0.40
codegen_flags: <defaults>
</compile_context>

<pallas_src>
import functools

import jax
import jax.numpy as jnp
from jax.experimental import pallas as pl
from jax.experimental.pallas import tpu as pltpu


# ---------------------------------------------------------------------------
# Fused kernel: [mean filter] + 1x1 conv + ReLU + 3x3 conv + bias + residual
# ---------------------------------------------------------------------------
def _fused_forward_kernel(x_ref, w1_ref, b1_ref, w2_ref, b2_ref, o_ref, yext_ref,
                          *, mode, fs, W):
    """One grid step = one batch element.

    x_ref   : (B, Cin, H*W) f32   whole input, resident (constant index_map)
    w1_ref  : (Cout, Cin)   bf16  1x1 conv weight (resident)
    b1_ref  : (Cout, 1)     f32
    w2_ref  : (9, Cin, Cout) bf16 3x3 conv weight, one (Cin, Cout) slab per tap (resident)
    b2_ref  : (Cin, 1)      f32
    o_ref   : (Cin, H*W)    f32   lane-dense interior-only output block
    yext_ref: (Cout, H*W + 2*(W+1)) bf16 scratch — zero-extended ReLU activation
    """
    b = pl.program_id(0)
    B = x_ref.shape[0]
    Cout = w1_ref.shape[0]
    HW = o_ref.shape[1]
    E = W + 1                                    # max |flat shift| of a 3x3 tap

    xb = x_ref[b]                                # (Cin, HW) f32 — residual input

    # --- mean filter along the batch axis (replicate padding), fused in-kernel ---
    if mode > 1:
        h = fs // 2
        feats = None
        for j in range(-h, h + 1):               # static unroll over the (small) filter size
            v = x_ref[jnp.clip(b + j, 0, B - 1)]
            feats = v if feats is None else feats + v
        feats = feats * (1.0 / fs)
    else:
        feats = xb

    # --- 1x1 conv + bias + ReLU on the MXU (bf16 operands, f32 accumulate) ---
    y1 = jnp.dot(w1_ref[...], feats.astype(jnp.bfloat16),
                 preferred_element_type=jnp.float32)          # (Cout, HW)
    y1 = jnp.maximum(y1 + b1_ref[...], 0.0)

    # --- stage into a zero-extended bf16 scratch so each 3x3 tap is a static lane slice ---
    # Only the two E-wide border strips need zeroing; the interior is overwritten every step.
    zstrip = jnp.zeros((Cout, E), jnp.bfloat16)
    yext_ref[:, 0:E] = zstrip
    yext_ref[:, E + HW:E + HW + E] = zstrip
    yext_ref[:, E:E + HW] = y1.astype(jnp.bfloat16)

    # Column-wrap masks (row out-of-range shifts always land in the zero extension).
    col = jax.lax.broadcasted_iota(jnp.int32, (1, HW), 1) % W
    not_last = col != (W - 1)                    # tap dw=+1 invalid at j == W-1
    not_first = col != 0                         # tap dw=-1 invalid at j == 0

    # --- 3x3 conv as 9 shifted (Cin,Cout)x(Cout,HW) MXU dots, + bias + residual ---
    acc = xb + b2_ref[...]                       # residual + bias, f32
    for k in range(9):
        dh, dw = k // 3 - 1, k % 3 - 1
        start = E + dh * W + dw
        tap = yext_ref[:, start:start + HW]      # (Cout, HW) bf16
        if dw == 1:
            tap = jnp.where(not_last, tap, jnp.zeros_like(tap))
        elif dw == -1:
            tap = jnp.where(not_first, tap, jnp.zeros_like(tap))
        acc = acc + jnp.dot(w2_ref[k], tap, preferred_element_type=jnp.float32)

    o_ref[...] = acc


def mean_filter_module_forward(x, params, *, mode=1, filter_size=3):
    """MeanFilterModule.forward(input_tensor, mode) — single fused pallas_call."""
    assert filter_size % 2 == 1, "filter_size must be odd (replicate-pad conv1d requires it)"
    B, Cin, H, W = x.shape
    Cout = params["w1"].shape[0]
    HW = H * W

    # Free (metadata-only) reshape; whole input fits comfortably in VMEM at these sizes.
    # TODO(synk): for very large B*Cin*H*W, add an H-tiled grid instead of a fully resident input.
    x2 = x.reshape(B, Cin, HW).astype(jnp.float32)

    w1 = params["w1"].reshape(Cout, Cin).astype(jnp.bfloat16)
    b1 = params["b1"].reshape(Cout, 1).astype(jnp.float32)
    # torch Conv2d(Cout -> Cin, k=3) weight is (Cin, Cout, 3, 3) -> (9, Cin, Cout): one slab per tap
    w2 = jnp.transpose(params["w2"], (2, 3, 0, 1)).reshape(9, Cin, Cout).astype(jnp.bfloat16)
    b2 = params["b2"].reshape(Cin, 1).astype(jnp.float32)

    const2 = lambda b: (0, 0)
    const3 = lambda b: (0, 0, 0)
    out = pl.pallas_call(
        functools.partial(_fused_forward_kernel, mode=mode, fs=filter_size, W=W),
        out_shape=jax.ShapeDtypeStruct((B, Cin, HW), jnp.float32),
        grid=(B,),
        in_specs=[
            pl.BlockSpec((B, Cin, HW), const3),      # whole x, resident (mean filter + residual)
            pl.BlockSpec((Cout, Cin), const2),       # w1 (resident, bf16)
            pl.BlockSpec((Cout, 1), const2),         # b1
            pl.BlockSpec((9, Cin, Cout), const3),    # w2 (resident, bf16)
            pl.BlockSpec((Cin, 1), const2),          # b2
        ],
        out_specs=pl.BlockSpec((None, Cin, HW), lambda b: (b, 0, 0)),
        scratch_shapes=[pltpu.VMEM((Cout, HW + 2 * (W + 1)), jnp.bfloat16)],
        compiler_params=pltpu.CompilerParams(dimension_semantics=("parallel",)),
    )(x2, w1, b1, w2, b2)

    return out.reshape(B, Cin, H, W)


# ---------------------------------------------------------------------------
# Pure-JAX reference (same bf16-operand / f32-accumulate policy) for validation
# ---------------------------------------------------------------------------
def _reference_forward(x, params, *, mode=1, filter_size=3):
    feats = x
    if mode > 1:
        N = x.shape[0]
        h = filter_size // 2
        x2 = x.reshape(N, -1)
        xp = jnp.pad(x2, ((h, h), (0, 0)), mode="edge")
        feats = jnp.mean(jnp.stack([xp[j:j + N] for j in range(filter_size)], 0),
                         axis=0).reshape(x.shape)
    Cout = params["w1"].shape[0]
    Cin, H, W = x.shape[1], x.shape[2], x.shape[3]
    w1 = params["w1"].reshape(Cout, Cin).astype(jnp.bfloat16)
    w2 = params["w2"].astype(jnp.bfloat16)
    y1 = jnp.einsum("oi,bihw->bohw", w1, feats.astype(jnp.bfloat16),
                    preferred_element_type=jnp.float32)
    y1 = jnp.maximum(y1 + params["b1"][None, :, None, None], 0.0)
    y1p = jnp.pad(y1, ((0, 0), (0, 0), (1, 1), (1, 1)))
    out = params["b2"][None, :, None, None] + x
    for kh in range(3):
        for kw in range(3):
            out = out + jnp.einsum("io,bohw->bihw", w2[:, :, kh, kw],
                                   y1p[:, :, kh:kh + H, kw:kw + W].astype(jnp.bfloat16),
                                   preferred_element_type=jnp.float32)
    return out


if __name__ == "__main__":
    key = jax.random.PRNGKey(0)
    kx, k1, k2, k3, k4 = jax.random.split(key, 5)

    B, Cin, H, W = 2, 4, 16, 16               # NCHW, as the torch module expects
    Cout, filter_size = 8, 3

    x = jax.random.normal(kx, (B, Cin, H, W), jnp.float32)
    params = {
        "w1": 0.3 * jax.random.normal(k1, (Cout, Cin, 1, 1), jnp.float32),   # Conv2d(Cin->Cout, k=1)
        "b1": 0.1 * jax.random.normal(k2, (Cout,), jnp.float32),
        "w2": 0.3 * jax.random.normal(k3, (Cin, Cout, 3, 3), jnp.float32),   # Conv2d(Cout->Cin, k=3, p=1)
        "b2": 0.1 * jax.random.normal(k4, (Cin,), jnp.float32),
    }

    fwd = jax.jit(mean_filter_module_forward, static_argnames=("mode", "filter_size"))

    out_m1 = fwd(x, params, mode=1, filter_size=filter_size)   # default path (no mean filter)
    out_m2 = fwd(x, params, mode=2, filter_size=filter_size)   # mean-filter path
    out_m1, out_m2 = jax.block_until_ready((out_m1, out_m2))

    for out, mode in ((out_m1, 1), (out_m2, 2)):
        assert out.shape == (B, Cin, H, W) and out.dtype == jnp.float32
        assert bool(jnp.all(jnp.isfinite(out)))
        ref = _reference_forward(x, params, mode=mode, filter_size=filter_size)
        err = float(jnp.max(jnp.abs(out - ref)))
        assert err < 2e-2, f"mode={mode}: max abs err {err}"

    print("KERNEL_OK")
</pallas_src>

<mosaic_0001>
module attributes {stable_mosaic.version = 11 : i64} {
  func.func @_fused_forward_kernel(%arg0: i32, %arg1: memref<2x4x256xf32, #tpu.memory_space<vmem>>, %arg2: memref<8x4xbf16, #tpu.memory_space<vmem>>, %arg3: memref<8x1xf32, #tpu.memory_space<vmem>>, %arg4: memref<9x4x8xbf16, #tpu.memory_space<vmem>>, %arg5: memref<4x1xf32, #tpu.memory_space<vmem>>, %arg6: memref<1x4x256xf32, #tpu.memory_space<vmem>>, %arg7: memref<8x290xbf16, #tpu.memory_space<vmem>>) attributes {dimension_semantics = [#tpu.dimension_semantics<parallel>], iteration_bounds = array<i64: 2>, scalar_prefetch = 0 : i64, scratch_operands = 1 : i64, tpu.core_type = #tpu.core_type<tc>, window_params = [{pipeline_mode = #tpu.pipeline_mode<synchronous>, transform_indices = @transform_0, window_bounds = array<i64: 2, 4, 256>}, {pipeline_mode = #tpu.pipeline_mode<synchronous>, transform_indices = @transform_1, window_bounds = array<i64: 8, 4>}, {pipeline_mode = #tpu.pipeline_mode<synchronous>, transform_indices = @transform_2, window_bounds = array<i64: 8, 1>}, {pipeline_mode = #tpu.pipeline_mode<synchronous>, transform_indices = @transform_3, window_bounds = array<i64: 9, 4, 8>}, {pipeline_mode = #tpu.pipeline_mode<synchronous>, transform_indices = @transform_4, window_bounds = array<i64: 4, 1>}, {transform_indices = @transform_5, window_bounds = array<i64: 1, 4, 256>}]} {
    %0 = arith.index_cast %arg0 : i32 to index
    %c0 = arith.constant 0 : index
    %c0_0 = arith.constant 0 : index
    %1 = vector.load %arg1[%0, %c0, %c0_0] : memref<2x4x256xf32, #tpu.memory_space<vmem>>, vector<1x4x256xf32>
    %2 = vector.shape_cast %1 : vector<1x4x256xf32> to vector<4x256xf32>
    %c0_1 = arith.constant 0 : index
    %c0_2 = arith.constant 0 : index
    %3 = vector.load %arg2[%c0_1, %c0_2] : memref<8x4xbf16, #tpu.memory_space<vmem>>, vector<8x4xbf16>
    %4 = arith.truncf %2 : vector<4x256xf32> to vector<4x256xbf16>
    %cst = arith.constant dense<0.000000e+00> : vector<8x256xf32>
    %5 = tpu.matmul %3, %4, %cst {dimension_numbers = #tpu.dot_dimension_numbers<[1], [0], [0], [1], [0, 0, 1, 1], [], []>} : vector<8x4xbf16>, vector<4x256xbf16>, vector<8x256xf32> -> vector<8x256xf32>
    %c0_3 = arith.constant 0 : index
    %c0_4 = arith.constant 0 : index
    %6 = vector.load %arg3[%c0_3, %c0_4] : memref<8x1xf32, #tpu.memory_space<vmem>>, vector<8x1xf32>
    %7 = vector.broadcast %6 : vector<8x1xf32> to vector<8x256xf32>
    %8 = arith.addf %5, %7 : vector<8x256xf32>
    %cst_5 = arith.constant 0.000000e+00 : f32
    %9 = vector.broadcast %cst_5 : f32 to vector<8x256xf32>
    %10 = arith.maximumf %8, %9 : vector<8x256xf32>
    %cst_6 = arith.constant 0.000000e+00 : bf16
    %11 = vector.broadcast %cst_6 : bf16 to vector<8x17xbf16>
    %c0_7 = arith.constant 0 : index
    %c0_8 = arith.constant 0 : index
    %12 = vector.load %arg7[%c0_7, %c0_8] : memref<8x290xbf16, #tpu.memory_space<vmem>>, vector<8x17xbf16>
    tpu.vector_store %arg7[%c0_7, %c0_8], %11 {strides = array<i32>} : memref<8x290xbf16, #tpu.memory_space<vmem>>, vector<8x17xbf16>,
    %c0_9 = arith.constant 0 : index
    %c273 = arith.constant 273 : index
    %13 = vector.load %arg7[%c0_9, %c273] : memref<8x290xbf16, #tpu.memory_space<vmem>>, vector<8x17xbf16>
    tpu.vector_store %arg7[%c0_9, %c273], %11 {strides = array<i32>} : memref<8x290xbf16, #tpu.memory_space<vmem>>, vector<8x17xbf16>,
    %14 = arith.truncf %10 : vector<8x256xf32> to vector<8x256xbf16>
    %c0_10 = arith.constant 0 : index
    %c17 = arith.constant 17 : index
    %15 = vector.load %arg7[%c0_10, %c17] : memref<8x290xbf16, #tpu.memory_space<vmem>>, vector<8x256xbf16>
    tpu.vector_store %arg7[%c0_10, %c17], %14 {strides = array<i32>} : memref<8x290xbf16, #tpu.memory_space<vmem>>, vector<8x256xbf16>,
    %16 = tpu.iota {dimensions = array<i32: 1>} : vector<1x256xi32>
    %c16_i32 = arith.constant 16 : i32
    %c0_i32 = arith.constant 0 : i32
    %17 = arith.cmpi eq, %c16_i32, %c0_i32 : i32
    %c1_i32 = arith.constant 1 : i32
    %18 = arith.select %17, %c1_i32, %c16_i32 : i32
    %19 = vector.broadcast %18 : i32 to vector<1x256xi32>
    %20 = arith.remsi %16, %19 : vector<1x256xi32>
    %c0_i32_11 = arith.constant 0 : i32
    %21 = vector.broadcast %c0_i32_11 : i32 to vector<1x256xi32>
    %22 = arith.cmpi ne, %20, %21 : vector<1x256xi32>
    %c0_i32_12 = arith.constant 0 : i32
    %23 = vector.broadcast %c0_i32_12 : i32 to vector<1x256xi32>
    %24 = arith.cmpi slt, %20, %23 : vector<1x256xi32>
    %c0_i32_13 = arith.constant 0 : i32
    %25 = arith.cmpi slt, %18, %c0_i32_13 : i32
    %26 = vector.broadcast %25 : i1 to vector<1x256xi1>
    %27 = vector.broadcast %26 : vector<1x256xi1> to vector<1x256xi1>
    %28 = arith.xori %24, %27 : vector<1x256xi1>
    %29 = arith.andi %28, %22 : vector<1x256xi1>
    %30 = vector.broadcast %18 : i32 to vector<1x256xi32>
    %31 = arith.addi %20, %30 : vector<1x256xi32>
    %32 = arith.select %29, %31, %20 : vector<1x256xi1>, vector<1x256xi32>
    %c15_i32 = arith.constant 15 : i32
    %33 = vector.broadcast %c15_i32 : i32 to vector<1x256xi32>
    %34 = arith.cmpi ne, %32, %33 : vector<1x256xi32>
    %c0_i32_14 = arith.constant 0 : i32
    %35 = vector.broadcast %c0_i32_14 : i32 to vector<1x256xi32>
    %36 = arith.cmpi ne, %32, %35 : vector<1x256xi32>
    %c0_15 = arith.constant 0 : index
    %c0_16 = arith.constant 0 : index
    %37 = vector.load %arg5[%c0_15, %c0_16] : memref<4x1xf32, #tpu.memory_space<vmem>>, vector<4x1xf32>
    %38 = vector.broadcast %37 : vector<4x1xf32> to vector<4x256xf32>
    %39 = arith.addf %2, %38 : vector<4x256xf32>
    %c0_17 = arith.constant 0 : index
    %c0_18 = arith.constant 0 : index
    %40 = vector.load %arg7[%c0_17, %c0_18] : memref<8x290xbf16, #tpu.memory_space<vmem>>, vector<8x256xbf16>
    %cst_19 = arith.constant 0.000000e+00 : bf16
    %41 = vector.broadcast %cst_19 : bf16 to vector<8x256xbf16>
    %42 = vector.shape_cast %36 : vector<1x256xi1> to vector<1x256xi1>
    %43 = vector.broadcast %42 : vector<1x256xi1> to vector<8x256xi1>
    %44 = arith.select %43, %40, %41 : vector<8x256xi1>, vector<8x256xbf16>
    %c0_20 = arith.constant 0 : index
    %c0_21 = arith.constant 0 : index
    %c0_22 = arith.constant 0 : index
    %45 = vector.load %arg4[%c0_20, %c0_21, %c0_22] : memref<9x4x8xbf16, #tpu.memory_space<vmem>>, vector<1x4x8xbf16>
    %46 = vector.shape_cast %45 : vector<1x4x8xbf16> to vector<4x8xbf16>
    %cst_23 = arith.constant dense<0.000000e+00> : vector<4x256xf32>
    %47 = tpu.matmul %46, %44, %cst_23 {dimension_numbers = #tpu.dot_dimension_numbers<[1], [0], [0], [1], [0, 0, 1, 1], [], []>} : vector<4x8xbf16>, vector<8x256xbf16>, vector<4x256xf32> -> vector<4x256xf32>
    %48 = arith.addf %39, %47 : vector<4x256xf32>
    %c0_24 = arith.constant 0 : index
    %c1 = arith.constant 1 : index
    %49 = vector.load %arg7[%c0_24, %c1] : memref<8x290xbf16, #tpu.memory_space<vmem>>, vector<8x256xbf16>
    %c1_25 = arith.constant 1 : index
    %c0_26 = arith.constant 0 : index
    %c0_27 = arith.constant 0 : index
    %50 = vector.load %arg4[%c1_25, %c0_26, %c0_27] : memref<9x4x8xbf16, #tpu.memory_space<vmem>>, vector<1x4x8xbf16>
    %51 = vector.shape_cast %50 : vector<1x4x8xbf16> to vector<4x8xbf16>
    %cst_28 = arith.constant dense<0.000000e+00> : vector<4x256xf32>
    %52 = tpu.matmul %51, %49, %cst_28 {dimension_numbers = #tpu.dot_dimension_numbers<[1], [0], [0], [1], [0, 0, 1, 1], [], []>} : vector<4x8xbf16>, vector<8x256xbf16>, vector<4x256xf32> -> vector<4x256xf32>
    %53 = arith.addf %48, %52 : vector<4x256xf32>
    %c0_29 = arith.constant 0 : index
    %c2 = arith.constant 2 : index
    %54 = vector.load %arg7[%c0_29, %c2] : memref<8x290xbf16, #tpu.memory_space<vmem>>, vector<8x256xbf16>
    %cst_30 = arith.constant 0.000000e+00 : bf16
    %55 = vector.broadcast %cst_30 : bf16 to vector<8x256xbf16>
    %56 = vector.shape_cast %34 : vector<1x256xi1> to vector<1x256xi1>
    %57 = vector.broadcast %56 : vector<1x256xi1> to vector<8x256xi1>
    %58 = arith.select %57, %54, %55 : vector<8x256xi1>, vector<8x256xbf16>
    %c2_31 = arith.constant 2 : index
    %c0_32 = arith.constant 0 : index
    %c0_33 = arith.constant 0 : index
    %59 = vector.load %arg4[%c2_31, %c0_32, %c0_33] : memref<9x4x8xbf16, #tpu.memory_space<vmem>>, vector<1x4x8xbf16>
    %60 = vector.shape_cast %59 : vector<1x4x8xbf16> to vector<4x8xbf16>
    %cst_34 = arith.constant dense<0.000000e+00> : vector<4x256xf32>
    %61 = tpu.matmul %60, %58, %cst_34 {dimension_numbers = #tpu.dot_dimension_numbers<[1], [0], [0], [1], [0, 0, 1, 1], [], []>} : vector<4x8xbf16>, vector<8x256xbf16>, vector<4x256xf32> -> vector<4x256xf32>
    %62 = arith.addf %53, %61 : vector<4x256xf32>
    %c0_35 = arith.constant 0 : index
    %c16 = arith.constant 16 : index
    %63 = vector.load %arg7[%c0_35, %c16] : memref<8x290xbf16, #tpu.memory_space<vmem>>, vector<8x256xbf16>
    %cst_36 = arith.constant 0.000000e+00 : bf16
    %64 = vector.broadcast %cst_36 : bf16 to vector<8x256xbf16>
    %65 = vector.shape_cast %36 : vector<1x256xi1> to vector<1x256xi1>
    %66 = vector.broadcast %65 : vector<1x256xi1> to vector<8x256xi1>
    %67 = arith.select %66, %63, %64 : vector<8x256xi1>, vector<8x256xbf16>
    %c3 = arith.constant 3 : index
    %c0_37 = arith.constant 0 : index
    %c0_38 = arith.constant 0 : index
    %68 = vector.load %arg4[%c3, %c0_37, %c0_38] : memref<9x4x8xbf16, #tpu.memory_space<vmem>>, vector<1x4x8xbf16>
    %69 = vector.shape_cast %68 : vector<1x4x8xbf16> to vector<4x8xbf16>
    %cst_39 = arith.constant dense<0.000000e+00> : vector<4x256xf32>
    %70 = tpu.matmul %69, %67, %cst_39 {dimension_numbers = #tpu.dot_dimension_numbers<[1], [0], [0], [1], [0, 0, 1, 1], [], []>} : vector<4x8xbf16>, vector<8x256xbf16>, vector<4x256xf32> -> vector<4x256xf32>
    %71 = arith.addf %62, %70 : vector<4x256xf32>
    %c0_40 = arith.constant 0 : index
    %c17_41 = arith.constant 17 : index
    %72 = vector.load %arg7[%c0_40, %c17_41] : memref<8x290xbf16, #tpu.memory_space<vmem>>, vector<8x256xbf16>
    %c4 = arith.constant 4 : index
    %c0_42 = arith.constant 0 : index
    %c0_43 = arith.constant 0 : index
    %73 = vector.load %arg4[%c4, %c0_42, %c0_43] : memref<9x4x8xbf16, #tpu.memory_space<vmem>>, vector<1x4x8xbf16>
    %74 = vector.shape_cast %73 : vector<1x4x8xbf16> to vector<4x8xbf16>
    %cst_44 = arith.constant dense<0.000000e+00> : vector<4x256xf32>
    %75 = tpu.matmul %74, %72, %cst_44 {dimension_numbers = #tpu.dot_dimension_numbers<[1], [0], [0], [1], [0, 0, 1, 1], [], []>} : vector<4x8xbf16>, vector<8x256xbf16>, vector<4x256xf32> -> vector<4x256xf32>
    %76 = arith.addf %71, %75 : vector<4x256xf32>
    %c0_45 = arith.constant 0 : index
    %c18 = arith.constant 18 : index
    %77 = vector.load %arg7[%c0_45, %c18] : memref<8x290xbf16, #tpu.memory_space<vmem>>, vector<8x256xbf16>
    %cst_46 = arith.constant 0.000000e+00 : bf16
    %78 = vector.broadcast %cst_46 : bf16 to vector<8x256xbf16>
    %79 = vector.shape_cast %34 : vector<1x256xi1> to vector<1x256xi1>
    %80 = vector.broadcast %79 : vector<1x256xi1> to vector<8x256xi1>
    %81 = arith.select %80, %77, %78 : vector<8x256xi1>, vector<8x256xbf16>
    %c5 = arith.constant 5 : index
    %c0_47 = arith.constant 0 : index
    %c0_48 = arith.constant 0 : index
    %82 = vector.load %arg4[%c5, %c0_47, %c0_48] : memref<9x4x8xbf16, #tpu.memory_space<vmem>>, vector<1x4x8xbf16>
    %83 = vector.shape_cast %82 : vector<1x4x8xbf16> to vector<4x8xbf16>
    %cst_49 = arith.constant dense<0.000000e+00> : vector<4x256xf32>
    %84 = tpu.matmul %83, %81, %cst_49 {dimension_numbers = #tpu.dot_dimension_numbers<[1], [0], [0], [1], [0, 0, 1, 1], [], []>} : vector<4x8xbf16>, vector<8x256xbf16>, vector<4x256xf32> -> vector<4x256xf32>
    %85 = arith.addf %76, %84 : vector<4x256xf32>
    %c0_50 = arith.constant 0 : index
    %c32 = arith.constant 32 : index
    %86 = vector.load %arg7[%c0_50, %c32] : memref<8x290xbf16, #tpu.memory_space<vmem>>, vector<8x256xbf16>
    %cst_51 = arith.constant 0.000000e+00 : bf16
    %87 = vector.broadcast %cst_51 : bf16 to vector<8x256xbf16>
    %88 = vector.shape_cast %36 : vector<1x256xi1> to vector<1x256xi1>
    %89 = vector.broadcast %88 : vector<1x256xi1> to vector<8x256xi1>
    %90 = arith.select %89, %86, %87 : vector<8x256xi1>, vector<8x256xbf16>
    %c6 = arith.constant 6 : index
    %c0_52 = arith.constant 0 : index
    %c0_53 = arith.constant 0 : index
    %91 = vector.load %arg4[%c6, %c0_52, %c0_53] : memref<9x4x8xbf16, #tpu.memory_space<vmem>>, vector<1x4x8xbf16>
    %92 = vector.shape_cast %91 : vector<1x4x8xbf16> to vector<4x8xbf16>
    %cst_54 = arith.constant dense<0.000000e+00> : vector<4x256xf32>
    %93 = tpu.matmul %92, %90, %cst_54 {dimension_numbers = #tpu.dot_dimension_numbers<[1], [0], [0], [1], [0, 0, 1, 1], [], []>} : vector<4x8xbf16>, vector<8x256xbf16>, vector<4x256xf32> -> vector<4x256xf32>
    %94 = arith.addf %85, %93 : vector<4x256xf32>
    %c0_55 = arith.constant 0 : index
    %c33 = arith.constant 33 : index
    %95 = vector.load %arg7[%c0_55, %c33] : memref<8x290xbf16, #tpu.memory_space<vmem>>, vector<8x256xbf16>
    %c7 = arith.constant 7 : index
    %c0_56 = arith.constant 0 : index
    %c0_57 = arith.constant 0 : index
    %96 = vector.load %arg4[%c7, %c0_56, %c0_57] : memref<9x4x8xbf16, #tpu.memory_space<vmem>>, vector<1x4x8xbf16>
    %97 = vector.shape_cast %96 : vector<1x4x8xbf16> to vector<4x8xbf16>
    %cst_58 = arith.constant dense<0.000000e+00> : vector<4x256xf32>
    %98 = tpu.matmul %97, %95, %cst_58 {dimension_numbers = #tpu.dot_dimension_numbers<[1], [0], [0], [1], [0, 0, 1, 1], [], []>} : vector<4x8xbf16>, vector<8x256xbf16>, vector<4x256xf32> -> vector<4x256xf32>
    %99 = arith.addf %94, %98 : vector<4x256xf32>
    %c0_59 = arith.constant 0 : index
    %c34 = arith.constant 34 : index
    %100 = vector.load %arg7[%c0_59, %c34] : memref<8x290xbf16, #tpu.memory_space<vmem>>, vector<8x256xbf16>
    %cst_60 = arith.constant 0.000000e+00 : bf16
    %101 = vector.broadcast %cst_60 : bf16 to vector<8x256xbf16>
    %102 = vector.shape_cast %34 : vector<1x256xi1> to vector<1x256xi1>
    %103 = vector.broadcast %102 : vector<1x256xi1> to vector<8x256xi1>
    %104 = arith.select %103, %100, %101 : vector<8x256xi1>, vector<8x256xbf16>
    %c8 = arith.constant 8 : index
    %c0_61 = arith.constant 0 : index
    %c0_62 = arith.constant 0 : index
    %105 = vector.load %arg4[%c8, %c0_61, %c0_62] : memref<9x4x8xbf16, #tpu.memory_space<vmem>>, vector<1x4x8xbf16>
    %106 = vector.shape_cast %105 : vector<1x4x8xbf16> to vector<4x8xbf16>
    %cst_63 = arith.constant dense<0.000000e+00> : vector<4x256xf32>
    %107 = tpu.matmul %106, %104, %cst_63 {dimension_numbers = #tpu.dot_dimension_numbers<[1], [0], [0], [1], [0, 0, 1, 1], [], []>} : vector<4x8xbf16>, vector<8x256xbf16>, vector<4x256xf32> -> vector<4x256xf32>
    %108 = arith.addf %99, %107 : vector<4x256xf32>
    %c0_64 = arith.constant 0 : index
    %c0_65 = arith.constant 0 : index
    %c0_66 = arith.constant 0 : index
    %109 = vector.load %arg6[%c0_64, %c0_65, %c0_66] : memref<1x4x256xf32, #tpu.memory_space<vmem>>, vector<1x4x256xf32>
    %110 = vector.shape_cast %109 : vector<1x4x256xf32> to vector<4x256xf32>
    %111 = vector.shape_cast %108 : vector<4x256xf32> to vector<1x4x256xf32>
    tpu.vector_store %arg6[%c0_64, %c0_65, %c0_66], %111 {strides = array<i32>} : memref<1x4x256xf32, #tpu.memory_space<vmem>>, vector<1x4x256xf32>,
    return
  }
  func.func @transform_0(%arg0: i32) -> (i32, i32, i32) {
    %c0_i32 = arith.constant 0 : i32
    %c0_i32_0 = arith.constant 0 : i32
    %c0_i32_1 = arith.constant 0 : i32
    %c0_i32_2 = arith.constant 0 : i32
    return %c0_i32, %c0_i32_0, %c0_i32_1 : i32, i32, i32
  }
  func.func @transform_1(%arg0: i32) -> (i32, i32) {
    %c0_i32 = arith.constant 0 : i32
    %c0_i32_0 = arith.constant 0 : i32
    %c0_i32_1 = arith.constant 0 : i32
    return %c0_i32, %c0_i32_0 : i32, i32
  }
  func.func @transform_2(%arg0: i32) -> (i32, i32) {
    %c0_i32 = arith.constant 0 : i32
    %c0_i32_0 = arith.constant 0 : i32
    %c0_i32_1 = arith.constant 0 : i32
    return %c0_i32, %c0_i32_0 : i32, i32
  }
  func.func @transform_3(%arg0: i32) -> (i32, i32, i32) {
    %c0_i32 = arith.constant 0 : i32
    %c0_i32_0 = arith.constant 0 : i32
    %c0_i32_1 = arith.constant 0 : i32
    %c0_i32_2 = arith.constant 0 : i32
    return %c0_i32, %c0_i32_0, %c0_i32_1 : i32, i32, i32
  }
  func.func @transform_4(%arg0: i32) -> (i32, i32) {
    %c0_i32 = arith.constant 0 : i32
    %c0_i32_0 = arith.constant 0 : i32
    %c0_i32_1 = arith.constant 0 : i32
    return %c0_i32, %c0_i32_0 : i32, i32
  }
  func.func @transform_5(%arg0: i32) -> (i32, i32, i32) {
    %c0_i32 = arith.constant 0 : i32
    %c0_i32_0 = arith.constant 0 : i32
    %c0_i32_1 = arith.constant 0 : i32
    return %arg0, %c0_i32, %c0_i32_0 : i32, i32, i32
  }
}

</mosaic_0001>

<llo_original>
// kernel: mean_filter_module_forward.1
$region0: #{mean_filter_module_forward.1}
  #allocation0 [shape = 'u32[]', space=smem, size = 0x4, offset = 0x4, fixed_abs, tag = 'smem constant byte address 0x4 - core index']
  #allocation1 [shape = 'u32[144,128]{1,0:T(1,128)}', space=vmem, size = 0x12000, scoped, tag = 'internal scratch']
  #allocation2 [shape = 'bf16[8,290]{1,0:T(8,128)(2,1)}', space=vmem, size = 0x1800, scoped, tag = 'scratch operand']
  %s0 = inlined_call_operand.vmem [shape: f32[2,4,256], index: 0, kind: input, shape index: {}]
  %s1 = inlined_call_operand.vmem [shape: bf16[8,4], index: 1, kind: input, shape index: {}]
  %s2 = inlined_call_operand.vmem [shape: f32[8,1], index: 2, kind: input, shape index: {}]
  %s3 = inlined_call_operand.vmem [shape: bf16[9,4,8], index: 3, kind: input, shape index: {}]
  %s4 = inlined_call_operand.vmem [shape: f32[4,1], index: 4, kind: input, shape index: {}]
  %s5 = inlined_call_operand.vmem [shape: f32[2,4,256], index: 5, kind: output, shape index: {}]
  %s6 = sld [smem:[#allocation0]]
  $region53: #{mean_filter_module_forward.1} parent=0
    _
  %s8 = ssub.s32 1, %s6
  %s9 = scalar_select 0, %s8, %s6
  loop: start=0, step=1, limit=4
  $region2: #{mean_filter_module_forward.1} parent=0 // loop_pre_header
    _
  $region3: #{mean_filter_module_forward.1} parent=0 // loop_header
    %s11 = sphi 0, %s15
    %p12 = scmp.ge.s32.totalorder %s11, 4
    %s19 = sphi 0, %s19
    %s21 = sphi 0, %s19
    %s22 = sphi 0, %s21
    %s36 = sphi 0, %s22
    %s40 = sphi 0, %s40
    %s42 = sphi 0, %s40
    %s43 = sphi 0, %s42
    %s57 = sphi 0, %s43
    %s61 = sphi 0, %s61
    %s63 = sphi 0, %s61
    %s64 = sphi 0, %s63
    %s78 = sphi 0, %s64
    %s82 = sphi 0, %s82
    %s84 = sphi 0, %s82
    %s85 = sphi 0, %s84
    %s99 = sphi 0, %s85
    %s103 = sphi 0, %s103
    %s105 = sphi 0, %s103
    %s106 = sphi 0, %s105
    %s120 = sphi 0, %s106
    %s126 = sphi 0, %s128
    %s129 = sphi 0, %s126
    %s130 = sphi 0, %s129
    %s146 = sphi 0, %s130
  $region4: #{mean_filter_module_forward.1} parent=0 // loop_header_branch
    %14 = sbr.rel (%p12) target = $region8
  $region5: #{mean_filter_module_forward.1} parent=0 // loop_body
    %s16 = ssub.s32 %s11, 1
    %s17 = ssub.s32 %s11, 2
    %s18 = sadd.s32 %s11, 1
    %s20 = sadd.s32 %s19, 1
    %p23 = scmp.eq.s32.totalorder %s11, 1
    %p24 = scmp.ne.s32.totalorder %s19, %s21
    %p25 = scmp.eq.s32.totalorder %s11, 0
    %p26 = por %p24, %p25
    %p27 = scmp.ne.s32.totalorder %s19, %s21
    %p28 = scmp.eq.s32.totalorder %s16, 1
    %p29 = por %p27, %p28
    %p30 = scmp.ne.s32.totalorder %s21, %s22
    %p31 = scmp.eq.s32.totalorder %s16, 0
    %p32 = por %p30, %p31
    %p33 = scmp.ne.s32.totalorder %s21, %s22
    %p34 = scmp.eq.s32.totalorder %s17, 1
    %p35 = por %p33, %p34
    %p37 = scmp.ne.s32.totalorder %s22, %s36
    %p38 = scmp.eq.s32.totalorder %s17, 0
    %p39 = por %p37, %p38
    %s41 = sadd.s32 %s40, 1
    %p44 = scmp.eq.s32.totalorder %s11, 1
    %p45 = scmp.ne.s32.totalorder %s40, %s42
    %p46 = scmp.eq.s32.totalorder %s11, 0
    %p47 = por %p45, %p46
    %p48 = scmp.ne.s32.totalorder %s40, %s42
    %p49 = scmp.eq.s32.totalorder %s16, 1
    %p50 = por %p48, %p49
    %p51 = scmp.ne.s32.totalorder %s42, %s43
    %p52 = scmp.eq.s32.totalorder %s16, 0
    %p53 = por %p51, %p52
    %p54 = scmp.ne.s32.totalorder %s42, %s43
    %p55 = scmp.eq.s32.totalorder %s17, 1
    %p56 = por %p54, %p55
    %p58 = scmp.ne.s32.totalorder %s43, %s57
    %p59 = scmp.eq.s32.totalorder %s17, 0
    %p60 = por %p58, %p59
    %s62 = sadd.s32 %s61, 1
    %p65 = scmp.eq.s32.totalorder %s11, 1
    %p66 = scmp.ne.s32.totalorder %s61, %s63
    %p67 = scmp.eq.s32.totalorder %s11, 0
    %p68 = por %p66, %p67
    %p69 = scmp.ne.s32.totalorder %s61, %s63
    %p70 = scmp.eq.s32.totalorder %s16, 1
    %p71 = por %p69, %p70
    %p72 = scmp.ne.s32.totalorder %s63, %s64
    %p73 = scmp.eq.s32.totalorder %s16, 0
    %p74 = por %p72, %p73
    %p75 = scmp.ne.s32.totalorder %s63, %s64
    %p76 = scmp.eq.s32.totalorder %s17, 1
    %p77 = por %p75, %p76
    %p79 = scmp.ne.s32.totalorder %s64, %s78
    %p80 = scmp.eq.s32.totalorder %s17, 0
    %p81 = por %p79, %p80
    %s83 = sadd.s32 %s82, 1
    %p86 = scmp.eq.s32.totalorder %s11, 1
    %p87 = scmp.ne.s32.totalorder %s82, %s84
    %p88 = scmp.eq.s32.totalorder %s11, 0
    %p89 = por %p87, %p88
    %p90 = scmp.ne.s32.totalorder %s82, %s84
    %p91 = scmp.eq.s32.totalorder %s16, 1
    %p92 = por %p90, %p91
    %p93 = scmp.ne.s32.totalorder %s84, %s85
    %p94 = scmp.eq.s32.totalorder %s16, 0
    %p95 = por %p93, %p94
    %p96 = scmp.ne.s32.totalorder %s84, %s85
    %p97 = scmp.eq.s32.totalorder %s17, 1
    %p98 = por %p96, %p97
    %p100 = scmp.ne.s32.totalorder %s85, %s99
    %p101 = scmp.eq.s32.totalorder %s17, 0
    %p102 = por %p100, %p101
    %s104 = sadd.s32 %s103, 1
    %p107 = scmp.eq.s32.totalorder %s11, 1
    %p108 = scmp.ne.s32.totalorder %s103, %s105
    %p109 = scmp.eq.s32.totalorder %s11, 0
    %p110 = por %p108, %p109
    %p111 = scmp.ne.s32.totalorder %s103, %s105
    %p112 = scmp.eq.s32.totalorder %s16, 1
    %p113 = por %p111, %p112
    %p114 = scmp.ne.s32.totalorder %s105, %s106
    %p115 = scmp.eq.s32.totalorder %s16, 0
    %p116 = por %p114, %p115
    %p117 = scmp.ne.s32.totalorder %s105, %s106
    %p118 = scmp.eq.s32.totalorder %s17, 1
    %p119 = por %p117, %p118
    %p121 = scmp.ne.s32.totalorder %s106, %s120
    %p122 = scmp.eq.s32.totalorder %s17, 0
    %p123 = por %p121, %p122
    %s124 = ssub.s32 %s11, %s18
    %p125 = scmp.eq.s32.totalorder %s124, 0
    %s127 = sadd.s32 %s126, 1
    %s128 = scalar_select %p125, %s126, %s127
    %p131 = pneg %p125
    %p132 = scmp.eq.s32.totalorder %s11, 1
    %p133 = por %p131, %p132
    %p134 = scmp.ne.s32.totalorder %s126, %s129
    %p135 = scmp.eq.s32.totalorder %s11, 0
    %p136 = por %p134, %p135
    %p137 = scmp.ne.s32.totalorder %s126, %s129
    %p138 = scmp.eq.s32.totalorder %s16, 1
    %p139 = por %p137, %p138
    %p140 = scmp.ne.s32.totalorder %s129, %s130
    %p141 = scmp.eq.s32.totalorder %s16, 0
    %p142 = por %p140, %p141
    %p143 = scmp.ne.s32.totalorder %s129, %s130
    %p144 = scmp.eq.s32.totalorder %s17, 1
    %p145 = por %p143, %p144
    %p147 = scmp.ne.s32.totalorder %s130, %s146
    %p148 = scmp.eq.s32.totalorder %s17, 0
    %p149 = por %p147, %p148
    %p150 = scmp.le.s32.totalorder 1, %s11
    %p151 = scmp.lt.s32.totalorder %s11, 3
    %p152 = pnand %p150, %p151
    %p153 = pneg %p152
    // Predicated region
    $region9: #{mean_filter_module_forward.1} parent=5 // pred_check
      _
    $region10: #{mean_filter_module_forward.1} parent=5 // pred_check_branch
      %155 = sbr.rel (%p152) target = $region12
    $region11: #{mean_filter_module_forward.1} parent=5 // pred_region
      %s156 = ssub.s32 %s11, 1
      // Predicated region
      $region13: #{mean_filter_module_forward.1} parent=11 // pred_check
        %p157 = pneg %p32
      $region14: #{mean_filter_module_forward.1} parent=11 // pred_check_branch
        %159 = sbr.rel (%p157) target = $region16
      $region15: #{mean_filter_module_forward.1} parent=11 // pred_region
        _
      $region16: #{mean_filter_module_forward.1} parent=11 // pred_fallthru
        _
      // Predicated region
      $region17: #{mean_filter_module_forward.1} parent=11 // pred_check
        %p160 = pneg %p53
      $region18: #{mean_filter_module_forward.1} parent=11 // pred_check_branch
        %162 = sbr.rel (%p160) target = $region20
      $region19: #{mean_filter_module_forward.1} parent=11 // pred_region
        _
      $region20: #{mean_filter_module_forward.1} parent=11 // pred_fallthru
        _
      // Predicated region
      $region21: #{mean_filter_module_forward.1} parent=11 // pred_check
        %p163 = pneg %p74
      $region22: #{mean_filter_module_forward.1} parent=11 // pred_check_branch
        %165 = sbr.rel (%p163) target = $region24
      $region23: #{mean_filter_module_forward.1} parent=11 // pred_region
        _
      $region24: #{mean_filter_module_forward.1} parent=11 // pred_fallthru
        _
      // Predicated region
      $region25: #{mean_filter_module_forward.1} parent=11 // pred_check
        %p166 = pneg %p95
      $region26: #{mean_filter_module_forward.1} parent=11 // pred_check_branch
        %168 = sbr.rel (%p166) target = $region28
      $region27: #{mean_filter_module_forward.1} parent=11 // pred_region
        _
      $region28: #{mean_filter_module_forward.1} parent=11 // pred_fallthru
        _
      // Predicated region
      $region29: #{mean_filter_module_forward.1} parent=11 // pred_check
        %p169 = pneg %p116
      $region30: #{mean_filter_module_forward.1} parent=11 // pred_check_branch
        %171 = sbr.rel (%p169) target = $region32
      $region31: #{mean_filter_module_forward.1} parent=11 // pred_region
        _
      $region32: #{mean_filter_module_forward.1} parent=11 // pred_fallthru
        _
    $region12: #{mean_filter_module_forward.1} parent=5 // pred_fallthru
      _
    %p172 = scmp.lt.s32.totalorder %s11, 2
    // Predicated region
    $region33: #{mean_filter_module_forward.1} parent=5 // pred_check
      %p173 = pneg %p172
    $region34: #{mean_filter_module_forward.1} parent=5 // pred_check_branch
      %175 = sbr.rel (%p173) target = $region36
    $region35: #{mean_filter_module_forward.1} parent=5 // pred_region
      _
    $region36: #{mean_filter_module_forward.1} parent=5 // pred_fallthru
      _
    %p176 = scmp.le.s32.totalorder 1, %s11
    %p177 = scmp.lt.s32.totalorder %s11, 3
    %p178 = pnand %p176, %p177
    %p179 = pneg %p178
    // Predicated region
    $region37: #{mean_filter_module_forward.1} parent=5 // pred_check
      _
    $region38: #{mean_filter_module_forward.1} parent=5 // pred_check_branch
      %181 = sbr.rel (%p178) target = $region40
    $region39: #{mean_filter_module_forward.1} parent=5 // pred_region
      %s182 = ssub.s32 %s11, 1
      %p183 = pneg %p32
      %p184 = pneg %p29
      %p185 = pneg %p53
      %p186 = pneg %p50
      %p187 = pneg %p74
      %p188 = pneg %p71
      %p189 = pneg %p95
      %p190 = pneg %p92
      %p191 = pneg %p116
      %p192 = pneg %p113
      %p193 = pneg %p142
      %p194 = pneg %p139
      %p195 = scmp.lt.s32.totalorder %s16, 1
      %s196 = scalar_select %p195, %s16, 1
      %s197 = smul.addr %s196, 2
      %s198 = smul.addr %s197, 4
      %s199 = scalar_lea.vmem %s5, %s198
      %p200 = scmp.lt.s32.totalorder %s16, 1
      %s201 = scalar_select %p200, %s16, 1
      %s202 = smul.addr %s201, 2
      %s203 = smul.addr %s202, 4
      %s204 = scalar_lea.vmem %s5, %s203
      %s208 = smul.u32 %s16, 2
      %s209 = smul.addr %s208, 4
      %s210 = scalar_lea.vmem %s0, %s209
      %v211 = vld [vmem:[%s210] sm:$0xff]
      %v212 = vld [vmem:[%s1] sm:$0xf]
      %v214 = vcombine.high %v211, %v211
      %v216 = vpack.c.bf16 %v211, %v211
      %v217 = vpack.c.bf16 %v214, %v214
      %v218 = vld [vmem:[%s2] sm:$0xff]
      %220 = vset.pattern.permute.xlu0 0
      %221 = vperm.xlu0 %220, %v218
      %v222 = vpop.permute.xlu0 %221
      %vm224 = vcmask 31744
      %v226 = vsel %vm224, %v212, 0
      %vm228 = vcmask 1041408
      %v230 = vsel %vm228, %v216, 0
      %v233 = vsel %vm228, %v217, 0
      %235 = vmatprep.subr.bf16.mxu0 %v233
      %236 = vmatpush1.bf16.msra.mxu0 %v230
      %237 = vmatprep.subr.bf16.mxu0 0
      %238 = vmatpush1.bf16.msra.mxu0 0
      %239 = vmatprep.subr.bf16.mxu0 0
      %240 = vmatpush1.bf16.msra.mxu0 0
      %241 = vmatprep.subr.bf16.mxu0 0
      %242 = vmatpush1.bf16.msra.mxu0 0
      %243 = vmatprep.subr.bf16.mxu0 0
      %244 = vmatpush1.bf16.msra.mxu0 0
      %245 = vmatprep.subr.bf16.mxu0 0
      %246 = vmatpush1.bf16.msra.mxu0 0
      %247 = vmatprep.subr.bf16.mxu0 0
      %248 = vmatpush1.bf16.msra.mxu0 0
      %249 = vmatprep.subr.bf16.mxu0 0
      %250 = vmatpush1.bf16.msra.mxu0 0
      %251 = vmatprep.subr.bf16.mxu0 0
      %252 = vmatpush1.bf16.msra.mxu0 0
      %253 = vmatprep.subr.bf16.mxu0 0
      %254 = vmatpush1.bf16.msra.mxu0 0
      %255 = vmatprep.subr.bf16.mxu0 0
      %256 = vmatpush1.bf16.msra.mxu0 0
      %257 = vmatprep.subr.bf16.mxu0 0
      %258 = vmatpush1.bf16.msra.mxu0 0
      %259 = vmatprep.subr.bf16.mxu0 0
      %260 = vmatpush1.bf16.msra.mxu0 0
      %261 = vmatprep.subr.bf16.mxu0 0
      %262 = vmatpush1.bf16.msra.mxu0 0
      %263 = vmatprep.subr.bf16.mxu0 0
      %264 = vmatpush1.bf16.msra.mxu0 0
      %265 = vmatprep.subr.bf16.mxu0 0
      %266 = vmatpush1.bf16.msra.mxu0 0
      %267 = vmatprep.mubr.bf16.mxu0 0
      %268 = vmatmul.mubr.bf16.gmra.mrb[0].mxu0 %v226
      %v269 = vpop.f32.mrb[0].mxu0
      %v270 = vadd.f32 %v222, %v269
      %v271 = vpop.f32.mrb[0].mxu0
      %v272 = vadd.f32 %v222, %v271
      %v273 = vpop.f32.mrb[0].mxu0
      %v274 = vpop.f32.mrb[0].mxu0
      %275 = vdwg.mxu0
      %v276 = vmax.f32 %v270, 0.0
      %v277 = vmax.f32 %v272, 0.0
      %vm278 = vcmask 134144
      %279 = vst.msk [vmem:[#allocation2] sm:$0xf] %vm278, 0
      %vm280 = vcmask 273544
      %281 = vst.msk [vmem:[#allocation2 + $0x8] sm:$0xf] %vm280, 0
      %v282 = vpack.c.bf16 %v276, %v276
      %v283 = vpack.c.bf16 %v277, %v277
      %v286 = vunpack.c.l.b16 %v282
      %v287 = vunpack.c.l.b16 %v283
      %v288 = vpack.c.b16 %v287, %v286
      %289 = vrot.lane.b32.xlu0 %v288, 17
      %v290 = vpop.permute.xlu0 %289
      %v291 = vrot.slane %v290, 4
      %vm292 = vcmask 138240
      %v293 = vsel %vm292, %v291, %v290
      %vm296 = vcmask 1043592
      %vm297 = vcmask 1047556
      %vm298 = vmor %vm297, %vm296
      %299 = vst.msk [vmem:[#allocation2] sm:$0xff] %vm298, %v293
      %300 = vst.msk [vmem:[#allocation2 + $0x8] sm:$0xf] %vm278, %v291
      %v301 = vlaneseq
      %v302 = vand.u32 %v301, 127
      %v303 = vadd.s32 %v302, 128
      %vm304 = vcmp.lt.s32.totalorder %v302, 0
      %v305 = vsub.s32 0, %v302
      %v306 = vsel %vm304, %v305, %v302
      %v307 = vshrl.u32 %v306, 4
      %v308 = vand.u32 %v306, 15
      %v309 = vsub.s32 0, %v308
      %v310 = vsel %vm304, %v309, %v308
      %vm311 = vcmp.lt.s32.totalorder %v303, 0
      %v312 = vsub.s32 0, %v303
      %v313 = vsel %vm311, %v312, %v303
      %v314 = vshrl.u32 %v313, 4
      %v315 = vand.u32 %v313, 15
      %v316 = vsub.s32 0, %v315
      %v317 = vsel %vm311, %v316, %v315
      %vm318 = vcmp.ne.s32.totalorder %v310, 0
      %vm319 = vcmp.ne.s32.totalorder %v317, 0
      %vm320 = vcmp.lt.s32.totalorder %v310, 0
      %vm321 = vcmp.lt.s32.totalorder %v317, 0
      %vm322 = vmand %vm320, %vm318
      %vm323 = vmand %vm321, %vm319
      %v324 = vadd.s32 %v310, 16
      %v325 = vadd.s32 %v317, 16
      %v326 = vsel %vm322, %v324, %v310
      %v327 = vsel %vm323, %v325, %v317
      %vm328 = vcmp.ne.s32.totalorder %v326, 15
      %vm329 = vcmp.ne.s32.totalorder %v327, 15
      %vm330 = vcmp.ne.s32.totalorder %v326, 0
      %vm331 = vcmp.ne.s32.totalorder %v327, 0
      %v332 = vld [vmem:[%s4] sm:$0xf]
      %334 = vset.pattern.permute.xlu0 0
      %335 = vperm.xlu0 %334, %v332
      %v336 = vpop.permute.xlu0 %335
      %v338 = vunpack.c.l.s4 839922192
      %v339 = vunpack.c.0.s8 %v338
      %v340 = vlaneseq
      %v341 = vshrl.u32 %v340, 7
      %v342 = vsub.s32 %v339, %v341
      %v343 = vrot.slane %v336, %v342
      %v345 = vadd.f32 %v211, %v343
      %v346 = vld [vmem:[#allocation2] sm:$0xff]
      %v347 = vsel %vm330, 1, 0
      %v348 = vsel %vm331, 1, 0
      %vm349 = vcmp.eq.s32.totalorder %v347, 1
      %vm350 = vcmp.eq.s32.totalorder %v348, 1
      %vm351 = vmpackc.low %vm350, %vm349
      %v352 = vsel %vm351, %v346, 0
      %v353 = vld [vmem:[%s3] sm:$0x3]
      %v355 = vunpack.c.l.b16 %v352
      %v356 = vunpack.c.h.b16 %v352
      %v357 = vpack.c.b16 %v355, %v355
      %v358 = vpack.c.b16 %v356, %v356
      %vm359 = vcmask 64512
      %v361 = vsel %vm359, %v353, 0
      %vm363 = vcmask 1043456
      %v365 = vsel %vm363, %v357, 0
      %v368 = vsel %vm363, %v358, 0
      %370 = vmatprep.subr.bf16.mxu0 %v368
      %371 = vmatpush1.bf16.msra.mxu0 %v365
      %372 = vmatprep.subr.bf16.mxu0 0
      %373 = vmatpush1.bf16.msra.mxu0 0
      %374 = vmatprep.subr.bf16.mxu0 0
      %375 = vmatpush1.bf16.msra.mxu0 0
      %376 = vmatprep.subr.bf16.mxu0 0
      %377 = vmatpush1.bf16.msra.mxu0 0
      %378 = vmatprep.subr.bf16.mxu0 0
      %379 = vmatpush1.bf16.msra.mxu0 0
      %380 = vmatprep.subr.bf16.mxu0 0
      %381 = vmatpush1.bf16.msra.mxu0 0
      %382 = vmatprep.subr.bf16.mxu0 0
      %383 = vmatpush1.bf16.msra.mxu0 0
      %384 = vmatprep.subr.bf16.mxu0 0
      %385 = vmatpush1.bf16.msra.mxu0 0
      %386 = vmatprep.subr.bf16.mxu0 0
      %387 = vmatpush1.bf16.msra.mxu0 0
      %388 = vmatprep.subr.bf16.mxu0 0
      %389 = vmatpush1.bf16.msra.mxu0 0
      %390 = vmatprep.subr.bf16.mxu0 0
      %391 = vmatpush1.bf16.msra.mxu0 0
      %392 = vmatprep.subr.bf16.mxu0 0
      %393 = vmatpush1.bf16.msra.mxu0 0
      %394 = vmatprep.subr.bf16.mxu0 0
      %395 = vmatpush1.bf16.msra.mxu0 0
      %396 = vmatprep.subr.bf16.mxu0 0
      %397 = vmatpush1.bf16.msra.mxu0 0
      %398 = vmatprep.subr.bf16.mxu0 0
      %399 = vmatpush1.bf16.msra.mxu0 0
      %400 = vmatprep.subr.bf16.mxu0 0
      %401 = vmatpush1.bf16.msra.mxu0 0
      %402 = vmatprep.mubr.bf16.mxu0 0
      %403 = vmatmul.mubr.bf16.gmra.mrb[0].mxu0 %v361
      %v404 = vpop.f32.mrb[0].mxu0
      %v405 = vadd.f32 0.0, %v404
      %v406 = vpop.f32.mrb[0].mxu0
      %v407 = vadd.f32 0.0, %v406
      %v408 = vpop.f32.mrb[0].mxu0
      %v409 = vpop.f32.mrb[0].mxu0
      %410 = vdwg.mxu0
      %v413 = vcombine.low %v405, %v407
      %v415 = vadd.f32 %v345, %v413
      %v416 = vld [vmem:[#allocation2] sm:$0xff]
      %v417 = vld [vmem:[#allocation2 + $0x8] sm:$0xf]
      %s418 = scalar_lea.vmem %s3, 2
      %v419 = vld [vmem:[%s418] sm:$0x3]
      %v422 = vunpack.c.l.b16 %v416
      %v423 = vunpack.c.h.b16 %v416
      %v424 = vunpack.c.l.b16 %v417
      %v425 = vpack.c.b16 %v422, %v422
      %v426 = vpack.c.b16 %v423, %v423
      %v427 = vpack.c.b16 %v424, %v424
      %428 = vrot.lane.b32.xlu0 %v425, 127
      %v429 = vpop.permute.xlu0 %428
      %430 = vrot.lane.b32.xlu0 %v426, 127
      %v431 = vpop.permute.xlu0 %430
      %432 = vrot.lane.b32.xlu0 %v427, 127
      %v433 = vpop.permute.xlu0 %432
      %vm434 = vcmask 1039360
      %v435 = vsel %vm434, %v429, %v431
      %v436 = vsel %vm434, %v431, %v433
      %v438 = vsel %vm359, %v419, 0
      %v441 = vsel %vm363, %v435, 0
      %v444 = vsel %vm363, %v436, 0
      %446 = vmatprep.subr.bf16.mxu0 %v444
      %447 = vmatpush1.bf16.msra.mxu0 %v441
      %448 = vmatprep.subr.bf16.mxu0 0
      %449 = vmatpush1.bf16.msra.mxu0 0
      %450 = vmatprep.subr.bf16.mxu0 0
      %451 = vmatpush1.bf16.msra.mxu0 0
      %452 = vmatprep.subr.bf16.mxu0 0
      %453 = vmatpush1.bf16.msra.mxu0 0
      %454 = vmatprep.subr.bf16.mxu0 0
      %455 = vmatpush1.bf16.msra.mxu0 0
      %456 = vmatprep.subr.bf16.mxu0 0
      %457 = vmatpush1.bf16.msra.mxu0 0
      %458 = vmatprep.subr.bf16.mxu0 0
      %459 = vmatpush1.bf16.msra.mxu0 0
      %460 = vmatprep.subr.bf16.mxu0 0
      %461 = vmatpush1.bf16.msra.mxu0 0
      %462 = vmatprep.subr.bf16.mxu0 0
      %463 = vmatpush1.bf16.msra.mxu0 0
      %464 = vmatprep.subr.bf16.mxu0 0
      %465 = vmatpush1.bf16.msra.mxu0 0
      %466 = vmatprep.subr.bf16.mxu0 0
      %467 = vmatpush1.bf16.msra.mxu0 0
      %468 = vmatprep.subr.bf16.mxu0 0
      %469 = vmatpush1.bf16.msra.mxu0 0
      %470 = vmatprep.subr.bf16.mxu0 0
      %471 = vmatpush1.bf16.msra.mxu0 0
      %472 = vmatprep.subr.bf16.mxu0 0
      %473 = vmatpush1.bf16.msra.mxu0 0
      %474 = vmatprep.subr.bf16.mxu0 0
      %475 = vmatpush1.bf16.msra.mxu0 0
      %476 = vmatprep.subr.bf16.mxu0 0
      %477 = vmatpush1.bf16.msra.mxu0 0
      %478 = vmatprep.mubr.bf16.mxu0 0
      %479 = vmatmul.mubr.bf16.gmra.mrb[0].mxu0 %v438
      %v480 = vpop.f32.mrb[0].mxu0
      %v481 = vadd.f32 0.0, %v480
      %v482 = vpop.f32.mrb[0].mxu0
      %v483 = vadd.f32 0.0, %v482
      %v484 = vpop.f32.mrb[0].mxu0
      %v485 = vpop.f32.mrb[0].mxu0
      %486 = vdwg.mxu0
      %v489 = vcombine.low %v481, %v483
      %v491 = vadd.f32 %v415, %v489
      %v492 = vld [vmem:[#allocation2] sm:$0xff]
      %v493 = vld [vmem:[#allocation2 + $0x8] sm:$0xf]
      %v494 = vsel %vm328, 1, 0
      %v495 = vsel %vm329, 1, 0
      %vm496 = vcmp.eq.s32.totalorder %v494, 1
      %vm497 = vcmp.eq.s32.totalorder %v495, 1
      %vm498 = vmpackc.low %vm497, %vm496
      %v499 = vsel %vm498, 65537, 0
      %500 = vrot.lane.b32.xlu0 %v499, 2
      %v501 = vpop.permute.xlu0 %500
      %v502 = vrot.slane %v501, 4
      %vm503 = vcmask 15360
      %v504 = vsel %vm503, %v502, %v501
      %vm505 = vcmp.ne.s16.totalorder %v504, 0
      %vm506 = vcmp.ne.s16.totalorder %v502, 0
      %v507 = vsel %vm505, %v492, 0
      %v508 = vsel %vm506, %v493, 0
      %s509 = scalar_lea.vmem %s3, 4
      %v510 = vld [vmem:[%s509] sm:$0x3]
      %v513 = vunpack.c.l.b16 %v507
      %v514 = vunpack.c.h.b16 %v507
      %v515 = vunpack.c.l.b16 %v508
      %v516 = vpack.c.b16 %v513, %v513
      %v517 = vpack.c.b16 %v514, %v514
      %v518 = vpack.c.b16 %v515, %v515
      %519 = vrot.lane.b32.xlu0 %v516, 126
      %v520 = vpop.permute.xlu0 %519
      %521 = vrot.lane.b32.xlu0 %v517, 126
      %v522 = vpop.permute.xlu0 %521
      %523 = vrot.lane.b32.xlu0 %v518, 126
      %v524 = vpop.permute.xlu0 %523
      %vm525 = vcmask 1031168
      %v526 = vsel %vm525, %v520, %v522
      %v527 = vsel %vm525, %v522, %v524
      %v529 = vsel %vm359, %v510, 0
      %v532 = vsel %vm363, %v526, 0
      %v535 = vsel %vm363, %v527, 0
      %537 = vmatprep.subr.bf16.mxu0 %v535
      %538 = vmatpush1.bf16.msra.mxu0 %v532
      %539 = vmatprep.subr.bf16.mxu0 0
      %540 = vmatpush1.bf16.msra.mxu0 0
      %541 = vmatprep.subr.bf16.mxu0 0
      %542 = vmatpush1.bf16.msra.mxu0 0
      %543 = vmatprep.subr.bf16.mxu0 0
      %544 = vmatpush1.bf16.msra.mxu0 0
      %545 = vmatprep.subr.bf16.mxu0 0
      %546 = vmatpush1.bf16.msra.mxu0 0
      %547 = vmatprep.subr.bf16.mxu0 0
      %548 = vmatpush1.bf16.msra.mxu0 0
      %549 = vmatprep.subr.bf16.mxu0 0
      %550 = vmatpush1.bf16.msra.mxu0 0
      %551 = vmatprep.subr.bf16.mxu0 0
      %552 = vmatpush1.bf16.msra.mxu0 0
      %553 = vmatprep.subr.bf16.mxu0 0
      %554 = vmatpush1.bf16.msra.mxu0 0
      %555 = vmatprep.subr.bf16.mxu0 0
      %556 = vmatpush1.bf16.msra.mxu0 0
      %557 = vmatprep.subr.bf16.mxu0 0
      %558 = vmatpush1.bf16.msra.mxu0 0
      %559 = vmatprep.subr.bf16.mxu0 0
      %560 = vmatpush1.bf16.msra.mxu0 0
      %561 = vmatprep.subr.bf16.mxu0 0
      %562 = vmatpush1.bf16.msra.mxu0 0
      %563 = vmatprep.subr.bf16.mxu0 0
      %564 = vmatpush1.bf16.msra.mxu0 0
      %565 = vmatprep.subr.bf16.mxu0 0
      %566 = vmatpush1.bf16.msra.mxu0 0
      %567 = vmatprep.subr.bf16.mxu0 0
      %568 = vmatpush1.bf16.msra.mxu0 0
      %569 = vmatprep.mubr.bf16.mxu0 0
      %570 = vmatmul.mubr.bf16.gmra.mrb[0].mxu0 %v529
      %v571 = vpop.f32.mrb[0].mxu0
      %v572 = vadd.f32 0.0, %v571
      %v573 = vpop.f32.mrb[0].mxu0
      %v574 = vadd.f32 0.0, %v573
      %v575 = vpop.f32.mrb[0].mxu0
      %v576 = vpop.f32.mrb[0].mxu0
      %577 = vdwg.mxu0
      %v580 = vcombine.low %v572, %v574
      %v582 = vadd.f32 %v491, %v580
      %v583 = vld [vmem:[#allocation2] sm:$0xff]
      %v584 = vld [vmem:[#allocation2 + $0x8] sm:$0xf]
      %v585 = vsel %vm351, 65537, 0
      %586 = vrot.lane.b32.xlu0 %v585, 16
      %v587 = vpop.permute.xlu0 %586
      %v588 = vrot.slane %v587, 4
      %vm589 = vcmask 130048
      %v590 = vsel %vm589, %v588, %v587
      %vm591 = vcmp.ne.s16.totalorder %v590, 0
      %vm592 = vcmp.ne.s16.totalorder %v588, 0
      %v593 = vsel %vm591, %v583, 0
      %v594 = vsel %vm592, %v584, 0
      %s595 = scalar_lea.vmem %s3, 6
      %v596 = vld [vmem:[%s595] sm:$0x3]
      %v599 = vunpack.c.l.b16 %v593
      %v600 = vunpack.c.h.b16 %v593
      %v601 = vunpack.c.l.b16 %v594
      %v602 = vpack.c.b16 %v599, %v599
      %v603 = vpack.c.b16 %v600, %v600
      %v604 = vpack.c.b16 %v601, %v601
      %605 = vrot.lane.b32.xlu0 %v602, 112
      %v606 = vpop.permute.xlu0 %605
      %607 = vrot.lane.b32.xlu0 %v603, 112
      %v608 = vpop.permute.xlu0 %607
      %609 = vrot.lane.b32.xlu0 %v604, 112
      %v610 = vpop.permute.xlu0 %609
      %vm611 = vcmask 916480
      %v612 = vsel %vm611, %v606, %v608
      %v613 = vsel %vm611, %v608, %v610
      %v615 = vsel %vm359, %v596, 0
      %v618 = vsel %vm363, %v612, 0
      %v621 = vsel %vm363, %v613, 0
      %623 = vmatprep.subr.bf16.mxu0 %v621
      %624 = vmatpush1.bf16.msra.mxu0 %v618
      %625 = vmatprep.subr.bf16.mxu0 0
      %626 = vmatpush1.bf16.msra.mxu0 0
      %627 = vmatprep.subr.bf16.mxu0 0
      %628 = vmatpush1.bf16.msra.mxu0 0
      %629 = vmatprep.subr.bf16.mxu0 0
      %630 = vmatpush1.bf16.msra.mxu0 0
      %631 = vmatprep.subr.bf16.mxu0 0
      %632 = vmatpush1.bf16.msra.mxu0 0
      %633 = vmatprep.subr.bf16.mxu0 0
      %634 = vmatpush1.bf16.msra.mxu0 0
      %635 = vmatprep.subr.bf16.mxu0 0
      %636 = vmatpush1.bf16.msra.mxu0 0
      %637 = vmatprep.subr.bf16.mxu0 0
      %638 = vmatpush1.bf16.msra.mxu0 0
      %639 = vmatprep.subr.bf16.mxu0 0
      %640 = vmatpush1.bf16.msra.mxu0 0
      %641 = vmatprep.subr.bf16.mxu0 0
      %642 = vmatpush1.bf16.msra.mxu0 0
      %643 = vmatprep.subr.bf16.mxu0 0
      %644 = vmatpush1.bf16.msra.mxu0 0
      %645 = vmatprep.subr.bf16.mxu0 0
      %646 = vmatpush1.bf16.msra.mxu0 0
      %647 = vmatprep.subr.bf16.mxu0 0
      %648 = vmatpush1.bf16.msra.mxu0 0
      %649 = vmatprep.subr.bf16.mxu0 0
      %650 = vmatpush1.bf16.msra.mxu0 0
      %651 = vmatprep.subr.bf16.mxu0 0
      %652 = vmatpush1.bf16.msra.mxu0 0
      %653 = vmatprep.subr.bf16.mxu0 0
      %654 = vmatpush1.bf16.msra.mxu0 0
      %655 = vmatprep.mubr.bf16.mxu0 0
      %656 = vmatmul.mubr.bf16.gmra.mrb[0].mxu0 %v615
      %v657 = vpop.f32.mrb[0].mxu0
      %v658 = vadd.f32 0.0, %v657
      %v659 = vpop.f32.mrb[0].mxu0
      %v660 = vadd.f32 0.0, %v659
      %v661 = vpop.f32.mrb[0].mxu0
      %v662 = vpop.f32.mrb[0].mxu0
      %663 = vdwg.mxu0
      %v666 = vcombine.low %v658, %v660
      %v668 = vadd.f32 %v582, %v666
      %v669 = vld [vmem:[#allocation2] sm:$0xff]
      %v670 = vld [vmem:[#allocation2 + $0x8] sm:$0xf]
      %s671 = scalar_lea.vmem %s3, 8
      %v672 = vld [vmem:[%s671] sm:$0x3]
      %v675 = vunpack.c.l.b16 %v669
      %v676 = vunpack.c.h.b16 %v669
      %v677 = vunpack.c.l.b16 %v670
      %v678 = vpack.c.b16 %v675, %v675
      %v679 = vpack.c.b16 %v676, %v676
      %v680 = vpack.c.b16 %v677, %v677
      %681 = vrot.lane.b32.xlu0 %v678, 111
      %v682 = vpop.permute.xlu0 %681
      %683 = vrot.lane.b32.xlu0 %v679, 111
      %v684 = vpop.permute.xlu0 %683
      %685 = vrot.lane.b32.xlu0 %v680, 111
      %v686 = vpop.permute.xlu0 %685
      %vm687 = vcmask 908288
      %v688 = vsel %vm687, %v682, %v684
      %v689 = vsel %vm687, %v684, %v686
      %v691 = vsel %vm359, %v672, 0
      %v694 = vsel %vm363, %v688, 0
      %v697 = vsel %vm363, %v689, 0
      %699 = vmatprep.subr.bf16.mxu0 %v697
      %700 = vmatpush1.bf16.msra.mxu0 %v694
      %701 = vmatprep.subr.bf16.mxu0 0
      %702 = vmatpush1.bf16.msra.mxu0 0
      %703 = vmatprep.subr.bf16.mxu0 0
      %704 = vmatpush1.bf16.msra.mxu0 0
      %705 = vmatprep.subr.bf16.mxu0 0
      %706 = vmatpush1.bf16.msra.mxu0 0
      %707 = vmatprep.subr.bf16.mxu0 0
      %708 = vmatpush1.bf16.msra.mxu0 0
      %709 = vmatprep.subr.bf16.mxu0 0
      %710 = vmatpush1.bf16.msra.mxu0 0
      %711 = vmatprep.subr.bf16.mxu0 0
      %712 = vmatpush1.bf16.msra.mxu0 0
      %713 = vmatprep.subr.bf16.mxu0 0
      %714 = vmatpush1.bf16.msra.mxu0 0
      %715 = vmatprep.subr.bf16.mxu0 0
      %716 = vmatpush1.bf16.msra.mxu0 0
      %717 = vmatprep.subr.bf16.mxu0 0
      %718 = vmatpush1.bf16.msra.mxu0 0
      %719 = vmatprep.subr.bf16.mxu0 0
      %720 = vmatpush1.bf16.msra.mxu0 0
      %721 = vmatprep.subr.bf16.mxu0 0
      %722 = vmatpush1.bf16.msra.mxu0 0
      %723 = vmatprep.subr.bf16.mxu0 0
      %724 = vmatpush1.bf16.msra.mxu0 0
      %725 = vmatprep.subr.bf16.mxu0 0
      %726 = vmatpush1.bf16.msra.mxu0 0
      %727 = vmatprep.subr.bf16.mxu0 0
      %728 = vmatpush1.bf16.msra.mxu0 0
      %729 = vmatprep.subr.bf16.mxu0 0
      %730 = vmatpush1.bf16.msra.mxu0 0
      %731 = vmatprep.mubr.bf16.mxu0 0
      %732 = vmatmul.mubr.bf16.gmra.mrb[0].mxu0 %v691
      %v733 = vpop.f32.mrb[0].mxu0
      %v734 = vadd.f32 0.0, %v733
      %v735 = vpop.f32.mrb[0].mxu0
      %v736 = vadd.f32 0.0, %v735
      %v737 = vpop.f32.mrb[0].mxu0
      %v738 = vpop.f32.mrb[0].mxu0
      %739 = vdwg.mxu0
      %v742 = vcombine.low %v734, %v736
      %v744 = vadd.f32 %v668, %v742
      %v745 = vld [vmem:[#allocation2] sm:$0xff]
      %v746 = vld [vmem:[#allocation2 + $0x8] sm:$0xf]
      %747 = vrot.lane.b32.xlu0 %v499, 18
      %v748 = vpop.permute.xlu0 %747
      %v749 = vrot.slane %v748, 4
      %vm750 = vcmask 146432
      %v751 = vsel %vm750, %v749, %v748
      %vm752 = vcmp.ne.s16.totalorder %v751, 0
      %vm753 = vcmp.ne.s16.totalorder %v749, 0
      %v754 = vsel %vm752, %v745, 0
      %v755 = vsel %vm753, %v746, 0
      %s756 = scalar_lea.vmem %s3, 10
      %v757 = vld [vmem:[%s756] sm:$0x3]
      %v760 = vunpack.c.l.b16 %v754
      %v761 = vunpack.c.h.b16 %v754
      %v762 = vunpack.c.l.b16 %v755
      %v763 = vpack.c.b16 %v760, %v760
      %v764 = vpack.c.b16 %v761, %v761
      %v765 = vpack.c.b16 %v762, %v762
      %766 = vrot.lane.b32.xlu0 %v763, 110
      %v767 = vpop.permute.xlu0 %766
      %768 = vrot.lane.b32.xlu0 %v764, 110
      %v769 = vpop.permute.xlu0 %768
      %770 = vrot.lane.b32.xlu0 %v765, 110
      %v771 = vpop.permute.xlu0 %770
      %vm772 = vcmask 900096
      %v773 = vsel %vm772, %v767, %v769
      %v774 = vsel %vm772, %v769, %v771
      %v776 = vsel %vm359, %v757, 0
      %v779 = vsel %vm363, %v773, 0
      %v782 = vsel %vm363, %v774, 0
      %784 = vmatprep.subr.bf16.mxu0 %v782
      %785 = vmatpush1.bf16.msra.mxu0 %v779
      %786 = vmatprep.subr.bf16.mxu0 0
      %787 = vmatpush1.bf16.msra.mxu0 0
      %788 = vmatprep.subr.bf16.mxu0 0
      %789 = vmatpush1.bf16.msra.mxu0 0
      %790 = vmatprep.subr.bf16.mxu0 0
      %791 = vmatpush1.bf16.msra.mxu0 0
      %792 = vmatprep.subr.bf16.mxu0 0
      %793 = vmatpush1.bf16.msra.mxu0 0
      %794 = vmatprep.subr.bf16.mxu0 0
      %795 = vmatpush1.bf16.msra.mxu0 0
      %796 = vmatprep.subr.bf16.mxu0 0
      %797 = vmatpush1.bf16.msra.mxu0 0
      %798 = vmatprep.subr.bf16.mxu0 0
      %799 = vmatpush1.bf16.msra.mxu0 0
      %800 = vmatprep.subr.bf16.mxu0 0
      %801 = vmatpush1.bf16.msra.mxu0 0
      %802 = vmatprep.subr.bf16.mxu0 0
      %803 = vmatpush1.bf16.msra.mxu0 0
      %804 = vmatprep.subr.bf16.mxu0 0
      %805 = vmatpush1.bf16.msra.mxu0 0
      %806 = vmatprep.subr.bf16.mxu0 0
      %807 = vmatpush1.bf16.msra.mxu0 0
      %808 = vmatprep.subr.bf16.mxu0 0
      %809 = vmatpush1.bf16.msra.mxu0 0
      %810 = vmatprep.subr.bf16.mxu0 0
      %811 = vmatpush1.bf16.msra.mxu0 0
      %812 = vmatprep.subr.bf16.mxu0 0
      %813 = vmatpush1.bf16.msra.mxu0 0
      %814 = vmatprep.subr.bf16.mxu0 0
      %815 = vmatpush1.bf16.msra.mxu0 0
      %816 = vmatprep.mubr.bf16.mxu0 0
      %817 = vmatmul.mubr.bf16.gmra.mrb[0].mxu0 %v776
      %v818 = vpop.f32.mrb[0].mxu0
      %v819 = vadd.f32 0.0, %v818
      %v820 = vpop.f32.mrb[0].mxu0
      %v821 = vadd.f32 0.0, %v820
      %v822 = vpop.f32.mrb[0].mxu0
      %v823 = vpop.f32.mrb[0].mxu0
      %824 = vdwg.mxu0
      %v827 = vcombine.low %v819, %v821
      %v829 = vadd.f32 %v744, %v827
      %v830 = vld [vmem:[#allocation2] sm:$0xff]
      %v831 = vld [vmem:[#allocation2 + $0x8] sm:$0xf]
      %832 = vrot.lane.b32.xlu0 %v585, 32
      %v833 = vpop.permute.xlu0 %832
      %v834 = vrot.slane %v833, 4
      %vm835 = vcmask 261120
      %v836 = vsel %vm835, %v834, %v833
      %vm837 = vcmp.ne.s16.totalorder %v836, 0
      %vm838 = vcmp.ne.s16.totalorder %v834, 0
      %v839 = vsel %vm837, %v830, 0
      %v840 = vsel %vm838, %v831, 0
      %s841 = scalar_lea.vmem %s3, 12
      %v842 = vld [vmem:[%s841] sm:$0x3]
      %v845 = vunpack.c.l.b16 %v839
      %v846 = vunpack.c.h.b16 %v839
      %v847 = vunpack.c.l.b16 %v840
      %v848 = vpack.c.b16 %v845, %v845
      %v849 = vpack.c.b16 %v846, %v846
      %v850 = vpack.c.b16 %v847, %v847
      %851 = vrot.lane.b32.xlu0 %v848, 96
      %v852 = vpop.permute.xlu0 %851
      %853 = vrot.lane.b32.xlu0 %v849, 96
      %v854 = vpop.permute.xlu0 %853
      %855 = vrot.lane.b32.xlu0 %v850, 96
      %v856 = vpop.permute.xlu0 %855
      %vm857 = vcmask 785408
      %v858 = vsel %vm857, %v852, %v854
      %v859 = vsel %vm857, %v854, %v856
      %v861 = vsel %vm359, %v842, 0
      %v864 = vsel %vm363, %v858, 0
      %v867 = vsel %vm363, %v859, 0
      %869 = vmatprep.subr.bf16.mxu0 %v867
      %870 = vmatpush1.bf16.msra.mxu0 %v864
      %871 = vmatprep.subr.bf16.mxu0 0
      %872 = vmatpush1.bf16.msra.mxu0 0
      %873 = vmatprep.subr.bf16.mxu0 0
      %874 = vmatpush1.bf16.msra.mxu0 0
      %875 = vmatprep.subr.bf16.mxu0 0
      %876 = vmatpush1.bf16.msra.mxu0 0
      %877 = vmatprep.subr.bf16.mxu0 0
      %878 = vmatpush1.bf16.msra.mxu0 0
      %879 = vmatprep.subr.bf16.mxu0 0
      %880 = vmatpush1.bf16.msra.mxu0 0
      %881 = vmatprep.subr.bf16.mxu0 0
      %882 = vmatpush1.bf16.msra.mxu0 0
      %883 = vmatprep.subr.bf16.mxu0 0
      %884 = vmatpush1.bf16.msra.mxu0 0
      %885 = vmatprep.subr.bf16.mxu0 0
      %886 = vmatpush1.bf16.msra.mxu0 0
      %887 = vmatprep.subr.bf16.mxu0 0
      %888 = vmatpush1.bf16.msra.mxu0 0
      %889 = vmatprep.subr.bf16.mxu0 0
      %890 = vmatpush1.bf16.msra.mxu0 0
      %891 = vmatprep.subr.bf16.mxu0 0
      %892 = vmatpush1.bf16.msra.mxu0 0
      %893 = vmatprep.subr.bf16.mxu0 0
      %894 = vmatpush1.bf16.msra.mxu0 0
      %895 = vmatprep.subr.bf16.mxu0 0
      %896 = vmatpush1.bf16.msra.mxu0 0
      %897 = vmatprep.subr.bf16.mxu0 0
      %898 = vmatpush1.bf16.msra.mxu0 0
      %899 = vmatprep.subr.bf16.mxu0 0
      %900 = vmatpush1.bf16.msra.mxu0 0
      %901 = vmatprep.mubr.bf16.mxu0 0
      %902 = vmatmul.mubr.bf16.gmra.mrb[0].mxu0 %v861
      %v903 = vpop.f32.mrb[0].mxu0
      %v904 = vadd.f32 0.0, %v903
      %v905 = vpop.f32.mrb[0].mxu0
      %v906 = vadd.f32 0.0, %v905
      %v907 = vpop.f32.mrb[0].mxu0
      %v908 = vpop.f32.mrb[0].mxu0
      %909 = vdwg.mxu0
      %v912 = vcombine.low %v904, %v906
      %v914 = vadd.f32 %v829, %v912
      %v915 = vld [vmem:[#allocation2] sm:$0xff]
      %v916 = vld [vmem:[#allocation2 + $0x8] sm:$0xf]
      %s917 = scalar_lea.vmem %s3, 14
      %v918 = vld [vmem:[%s917] sm:$0x3]
      %v921 = vunpack.c.l.b16 %v915
      %v922 = vunpack.c.h.b16 %v915
      %v923 = vunpack.c.l.b16 %v916
      %v924 = vpack.c.b16 %v921, %v921
      %v925 = vpack.c.b16 %v922, %v922
      %v926 = vpack.c.b16 %v923, %v923
      %927 = vrot.lane.b32.xlu0 %v924, 95
      %v928 = vpop.permute.xlu0 %927
      %929 = vrot.lane.b32.xlu0 %v925, 95
      %v930 = vpop.permute.xlu0 %929
      %931 = vrot.lane.b32.xlu0 %v926, 95
      %v932 = vpop.permute.xlu0 %931
      %vm933 = vcmask 777216
      %v934 = vsel %vm933, %v928, %v930
      %v935 = vsel %vm933, %v930, %v932
      %v937 = vsel %vm359, %v918, 0
      %v940 = vsel %vm363, %v934, 0
      %v943 = vsel %vm363, %v935, 0
      %945 = vmatprep.subr.bf16.mxu0 %v943
      %946 = vmatpush1.bf16.msra.mxu0 %v940
      %947 = vmatprep.subr.bf16.mxu0 0
      %948 = vmatpush1.bf16.msra.mxu0 0
      %949 = vmatprep.subr.bf16.mxu0 0
      %950 = vmatpush1.bf16.msra.mxu0 0
      %951 = vmatprep.subr.bf16.mxu0 0
      %952 = vmatpush1.bf16.msra.mxu0 0
      %953 = vmatprep.subr.bf16.mxu0 0
      %954 = vmatpush1.bf16.msra.mxu0 0
      %955 = vmatprep.subr.bf16.mxu0 0
      %956 = vmatpush1.bf16.msra.mxu0 0
      %957 = vmatprep.subr.bf16.mxu0 0
      %958 = vmatpush1.bf16.msra.mxu0 0
      %959 = vmatprep.subr.bf16.mxu0 0
      %960 = vmatpush1.bf16.msra.mxu0 0
      %961 = vmatprep.subr.bf16.mxu0 0
      %962 = vmatpush1.bf16.msra.mxu0 0
      %963 = vmatprep.subr.bf16.mxu0 0
      %964 = vmatpush1.bf16.msra.mxu0 0
      %965 = vmatprep.subr.bf16.mxu0 0
      %966 = vmatpush1.bf16.msra.mxu0 0
      %967 = vmatprep.subr.bf16.mxu0 0
      %968 = vmatpush1.bf16.msra.mxu0 0
      %969 = vmatprep.subr.bf16.mxu0 0
      %970 = vmatpush1.bf16.msra.mxu0 0
      %971 = vmatprep.subr.bf16.mxu0 0
      %972 = vmatpush1.bf16.msra.mxu0 0
      %973 = vmatprep.subr.bf16.mxu0 0
      %974 = vmatpush1.bf16.msra.mxu0 0
      %975 = vmatprep.subr.bf16.mxu0 0
      %976 = vmatpush1.bf16.msra.mxu0 0
      %977 = vmatprep.mubr.bf16.mxu0 0
      %978 = vmatmul.mubr.bf16.gmra.mrb[0].mxu0 %v937
      %v979 = vpop.f32.mrb[0].mxu0
      %v980 = vadd.f32 0.0, %v979
      %v981 = vpop.f32.mrb[0].mxu0
      %v982 = vadd.f32 0.0, %v981
      %v983 = vpop.f32.mrb[0].mxu0
      %v984 = vpop.f32.mrb[0].mxu0
      %985 = vdwg.mxu0
      %v988 = vcombine.low %v980, %v982
      %v990 = vadd.f32 %v914, %v988
      %v991 = vld [vmem:[#allocation2] sm:$0xff]
      %v992 = vld [vmem:[#allocation2 + $0x8] sm:$0xf]
      %993 = vrot.lane.b32.xlu0 %v499, 34
      %v994 = vpop.permute.xlu0 %993
      %v995 = vrot.slane %v994, 4
      %vm996 = vcmask 277504
      %v997 = vsel %vm996, %v995, %v994
      %vm998 = vcmp.ne.s16.totalorder %v997, 0
      %vm999 = vcmp.ne.s16.totalorder %v995, 0
      %v1000 = vsel %vm998, %v991, 0
      %v1001 = vsel %vm999, %v992, 0
      %s1002 = scalar_lea.vmem %s3, 16
      %v1003 = vld [vmem:[%s1002] sm:$0x3]
      %v1006 = vunpack.c.l.b16 %v1000
      %v1007 = vunpack.c.h.b16 %v1000
      %v1008 = vunpack.c.l.b16 %v1001
      %v1009 = vpack.c.b16 %v1006, %v1006
      %v1010 = vpack.c.b16 %v1007, %v1007
      %v1011 = vpack.c.b16 %v1008, %v1008
      %1012 = vrot.lane.b32.xlu0 %v1009, 94
      %v1013 = vpop.permute.xlu0 %1012
      %1014 = vrot.lane.b32.xlu0 %v1010, 94
      %v1015 = vpop.permute.xlu0 %1014
      %1016 = vrot.lane.b32.xlu0 %v1011, 94
      %v1017 = vpop.permute.xlu0 %1016
      %vm1018 = vcmask 769024
      %v1019 = vsel %vm1018, %v1013, %v1015
      %v1020 = vsel %vm1018, %v1015, %v1017
      %v1022 = vsel %vm359, %v1003, 0
      %v1025 = vsel %vm363, %v1019, 0
      %v1028 = vsel %vm363, %v1020, 0
      %1030 = vmatprep.subr.bf16.mxu0 %v1028
      %1031 = vmatpush1.bf16.msra.mxu0 %v1025
      %1032 = vmatprep.subr.bf16.mxu0 0
      %1033 = vmatpush1.bf16.msra.mxu0 0
      %1034 = vmatprep.subr.bf16.mxu0 0
      %1035 = vmatpush1.bf16.msra.mxu0 0
      %1036 = vmatprep.subr.bf16.mxu0 0
      %1037 = vmatpush1.bf16.msra.mxu0 0
      %1038 = vmatprep.subr.bf16.mxu0 0
      %1039 = vmatpush1.bf16.msra.mxu0 0
      %1040 = vmatprep.subr.bf16.mxu0 0
      %1041 = vmatpush1.bf16.msra.mxu0 0
      %1042 = vmatprep.subr.bf16.mxu0 0
      %1043 = vmatpush1.bf16.msra.mxu0 0
      %1044 = vmatprep.subr.bf16.mxu0 0
      %1045 = vmatpush1.bf16.msra.mxu0 0
      %1046 = vmatprep.subr.bf16.mxu0 0
      %1047 = vmatpush1.bf16.msra.mxu0 0
      %1048 = vmatprep.subr.bf16.mxu0 0
      %1049 = vmatpush1.bf16.msra.mxu0 0
      %1050 = vmatprep.subr.bf16.mxu0 0
      %1051 = vmatpush1.bf16.msra.mxu0 0
      %1052 = vmatprep.subr.bf16.mxu0 0
      %1053 = vmatpush1.bf16.msra.mxu0 0
      %1054 = vmatprep.subr.bf16.mxu0 0
      %1055 = vmatpush1.bf16.msra.mxu0 0
      %1056 = vmatprep.subr.bf16.mxu0 0
      %1057 = vmatpush1.bf16.msra.mxu0 0
      %1058 = vmatprep.subr.bf16.mxu0 0
      %1059 = vmatpush1.bf16.msra.mxu0 0
      %1060 = vmatprep.subr.bf16.mxu0 0
      %1061 = vmatpush1.bf16.msra.mxu0 0
      %1062 = vmatprep.mubr.bf16.mxu0 0
      %1063 = vmatmul.mubr.bf16.gmra.mrb[0].mxu0 %v1022
      %v1064 = vpop.f32.mrb[0].mxu0
      %v1065 = vadd.f32 0.0, %v1064
      %v1066 = vpop.f32.mrb[0].mxu0
      %v1067 = vadd.f32 0.0, %v1066
      %v1068 = vpop.f32.mrb[0].mxu0
      %v1069 = vpop.f32.mrb[0].mxu0
      %1070 = vdwg.mxu0
      %v1073 = vcombine.low %v1065, %v1067
      %v1075 = vadd.f32 %v990, %v1073
      %1076 = vst [vmem:[%s204] sm:$0xff] %v1075
      %p1077 = scmp.lt.s32.totalorder %s16, 1
      %s1078 = scalar_select %p1077, %s16, 1
      %s1079 = smul.addr %s1078, 2
      %s1080 = smul.addr %s1079, 4
      %s1081 = scalar_lea.vmem %s5, %s1080
      // Predicated region
      $region41: #{mean_filter_module_forward.1} parent=39 // pred_check
        %p1082 = pneg %p139
      $region42: #{mean_filter_module_forward.1} parent=39 // pred_check_branch
        %1084 = sbr.rel (%p1082) target = $region44
      $region43: #{mean_filter_module_forward.1} parent=39 // pred_region
        _
      $region44: #{mean_filter_module_forward.1} parent=39 // pred_fallthru
        _
    $region40: #{mean_filter_module_forward.1} parent=5 // pred_fallthru
      _
    %p1085 = scmp.le.s32.totalorder 2, %s11
    // Predicated region
    $region45: #{mean_filter_module_forward.1} parent=5 // pred_check
      %p1086 = pneg %p1085
    $region46: #{mean_filter_module_forward.1} parent=5 // pred_check_branch
      %1088 = sbr.rel (%p1086) target = $region48
    $region47: #{mean_filter_module_forward.1} parent=5 // pred_region
      %s1089 = ssub.s32 %s11, 2
      // Predicated region
      $region49: #{mean_filter_module_forward.1} parent=47 // pred_check
        %p1090 = pneg %p145
      $region50: #{mean_filter_module_forward.1} parent=47 // pred_check_branch
        %1092 = sbr.rel (%p1090) target = $region52
      $region51: #{mean_filter_module_forward.1} parent=47 // pred_region
        %p1093 = scmp.lt.s32.totalorder %s17, 1
        %s1094 = scalar_select %p1093, %s17, 1
        %s1095 = smul.addr %s1094, 2
        %s1096 = smul.addr %s1095, 4
        %s1097 = scalar_lea.vmem %s5, %s1096
      $region52: #{mean_filter_module_forward.1} parent=47 // pred_fallthru
        _
    $region48: #{mean_filter_module_forward.1} parent=5 // pred_fallthru
      _
  $region6: #{mean_filter_module_forward.1} parent=0 // loop_footer
    %s15 = sadd.s32 1, %s11
  $region7: #{mean_filter_module_forward.1} parent=0 // loop_footer_branch
    %10 = sbr.rel target = $region3
  $region8: #{mean_filter_module_forward.1} parent=0 // loop_exit
    _

</llo_original>
